<compile_context>
chip_gen: v6e
topology: v6e:2x2x1
jax: 0.10.0
libtpu: 0.0.40
codegen_flags: <defaults>
</compile_context>

<pallas_src>
import functools

import jax
import jax.numpy as jnp
from jax import lax
from jax.experimental import pallas as pl
from jax.experimental.pallas import tpu as pltpu


def _gru_recurrence_kernel(gi_ref, h0_ref, w_ref, b_hn_ref, hN_ref, h_scr,
                           *, hidden, chunk, unroll):
    """One grid step == `chunk` timesteps of the GRU recurrence for one batch block.

    gi_ref:  (Tc, Bt, 3H)  lane-dense input pre-activations (b_ih all gates + b_h{r,z} folded)
    h0_ref:  (Bt, H)       initial hidden state (this batch block)
    w_ref:   (H, 3H)       recurrent weights, gates [r|z|n] concatenated along lanes (== W_hh^T)
    b_hn_ref:(1, H)        hidden bias of the n gate (must stay inside r * (.))
    hN_ref:  (Bt, H)       final hidden state output (this batch block)
    h_scr:   (Bt, H) f32   VMEM scratch carrying h across chunk grid steps
    """
    c = pl.program_id(1)
    H = hidden

    @pl.when(c == 0)
    def _():
        h_scr[...] = h0_ref[...].astype(jnp.float32)

    w_cat = w_ref[...]            # (H, 3H), resident
    b_hn = b_hn_ref[...]          # (1, H)

    def step(t, h):
        g = gi_ref[t]                                                     # (Bt, 3H) slab
        gh = jnp.dot(h, w_cat, preferred_element_type=jnp.float32)        # ONE MXU call
        r = jax.nn.sigmoid(g[:, 0 * H:1 * H] + gh[:, 0 * H:1 * H])        # biases prefolded
        z = jax.nn.sigmoid(g[:, 1 * H:2 * H] + gh[:, 1 * H:2 * H])
        n = jnp.tanh(g[:, 2 * H:3 * H] + r * (gh[:, 2 * H:3 * H] + b_hn))
        # Padded tail timesteps arrive with z-gate pre-activation = +1e9 -> z == 1.0
        # exactly -> h_new == h; no per-step select needed here.
        return (1.0 - z) * n + z * h

    h = lax.fori_loop(0, chunk, step, h_scr[...], unroll=unroll)
    h_scr[...] = h

    @pl.when(c == pl.num_programs(1) - 1)
    def _():
        hN_ref[...] = h.astype(hN_ref.dtype)


@functools.partial(jax.jit, static_argnames=("chunk", "vmem_budget_bytes"))
def gru_net_forward(x, h0, params, chunk=None, vmem_budget_bytes=8 * 1024 * 1024):
    """Forward pass matching GRUNet.forward(x, h).

    x:  (B, T, I) float32 (batch_first, like PyTorch)
    h0: (num_layers=1, B, H) float32
    returns (out_flat: (B*O,), h: (1, B, H))
    """
    w_ih, w_hh, b_ih, b_hh, w_fc, b_fc = (
        params["w_ih"], params["w_hh"], params["b_ih"],
        params["b_hh"], params["w_fc"], params["b_fc"])

    B, T, I = x.shape
    H = w_hh.shape[1]                     # w_hh: (3H, H)

    Bp = ((B + 7) // 8) * 8               # pad batch to full sublane groups
    # Batch tile: split in two when possible so the "parallel" batch grid axis can be
    # sharded across v7x's 2 TensorCores (no-op on v5e/v6e, 1 TC).
    Bt = Bp // 2 if (Bp % 16 == 0) else Bp

    # Timesteps per grid step, sized from a VMEM budget (double-buffered gi stream is the
    # dominant buffer; constants are single-buffered).
    if chunk is None:
        per_step_bytes = 2 * Bt * 3 * H * 4
        Tc = int(max(1, min(T, vmem_budget_bytes // per_step_bytes)))
    else:
        Tc = min(T, chunk)
    num_chunks = -(-T // Tc)
    T_pad = num_chunks * Tc

    x_tm = jnp.transpose(x, (1, 0, 2))                        # (T, B, I) time-major
    if Bp != B:
        x_tm = jnp.pad(x_tm, ((0, 0), (0, Bp - B), (0, 0)))
        h0_p = jnp.pad(h0[0], ((0, Bp - B), (0, 0)))
    else:
        h0_p = h0[0]

    # Hoisted, time-parallel input projection; fold b_ih (all gates) + b_h{r,z}.  b_hn
    # stays in-loop (it must remain inside r * (W_hn h + b_hn)).  Natural lane-dense
    # (T, Bp, 3H) layout — no gate-major relayout pass.
    bias = b_ih + jnp.concatenate([b_hh[:2 * H], jnp.zeros((H,), b_hh.dtype)])
    gi = jnp.dot(x_tm, w_ih.T, preferred_element_type=jnp.float32) + bias  # (T, Bp, 3H)

    if T_pad != T:
        # Padded tail timesteps: z-gate pre-activation = +1e9 -> sigmoid == 1.0 exactly
        # -> h_new == h identically (r/n lanes are 0, all finite).
        pad = jnp.zeros((T_pad - T, Bp, 3 * H), gi.dtype)
        pad = pad.at[:, :, H:2 * H].set(1e9)
        gi = jnp.concatenate([gi, pad], axis=0)

    w_cat = w_hh.T                                            # (H, 3H), gates [r|z|n]
    b_hn = b_hh[2 * H:3 * H].reshape(1, H)

    kernel = functools.partial(_gru_recurrence_kernel,
                               hidden=H, chunk=Tc, unroll=int(min(Tc, 8)))

    # VMEM accounting: 2x gi chunk (double-buffered stream) + single-buffered constants +
    # h0/out blocks + scratch; generous 4x margin, clamped under v7x's 64 MiB.
    gi_bytes = 2 * Tc * Bt * 3 * H * 4
    const_bytes = H * 3 * H * 4 + 2 * (2 * Bt * H * 4) + 2 * H * 4 + Bt * H * 4
    vmem_limit = int(min(max(4 * (gi_bytes + const_bytes), 4 << 20), 48 << 20))

    hN_p = pl.pallas_call(
        kernel,
        out_shape=jax.ShapeDtypeStruct((Bp, H), x.dtype),
        grid_spec=pltpu.PrefetchScalarGridSpec(
            num_scalar_prefetch=0,
            grid=(Bp // Bt, num_chunks),                      # (batch blocks, time chunks)
            in_specs=[
                pl.BlockSpec((Tc, Bt, 3 * H), lambda b, c: (c, b, 0)),   # gi stream
                pl.BlockSpec((Bt, H), lambda b, c: (b, 0)),              # h0
                pl.BlockSpec((H, 3 * H), lambda b, c: (0, 0),            # W_cat (constant)
                             pipeline_mode=pl.Buffered(1)),
                pl.BlockSpec((1, H), lambda b, c: (0, 0),                # b_hn (constant)
                             pipeline_mode=pl.Buffered(1)),
            ],
            out_specs=pl.BlockSpec((Bt, H), lambda b, c: (b, 0)),        # final hidden
            scratch_shapes=[pltpu.VMEM((Bt, H), jnp.float32)],           # carried h
        ),
        compiler_params=pltpu.CompilerParams(
            dimension_semantics=("parallel", "arbitrary"),    # batch parallel, time serial
            vmem_limit_bytes=vmem_limit),
    )(gi, h0_p, w_cat, b_hn)

    hN = hN_p[:B]                                             # drop batch padding
    # Final ReLU + fc: one-shot matmul in XLA (kernel stays recurrence-only).
    out = jnp.maximum(hN, 0.0) @ w_fc.T + b_fc
    return out.reshape(-1), hN[None, :, :]


def init_params(key, input_size, hidden_size, output_dim):
    """Deterministic parameter init mirroring nn.GRU / nn.Linear shapes."""
    k = jax.random.split(key, 6)
    s_gru = 1.0 / jnp.sqrt(hidden_size)
    s_fc = 1.0 / jnp.sqrt(hidden_size)
    return {
        "w_ih": jax.random.uniform(k[0], (3 * hidden_size, input_size),
                                   jnp.float32, -s_gru, s_gru),
        "w_hh": jax.random.uniform(k[1], (3 * hidden_size, hidden_size),
                                   jnp.float32, -s_gru, s_gru),
        "b_ih": jax.random.uniform(k[2], (3 * hidden_size,),
                                   jnp.float32, -s_gru, s_gru),
        "b_hh": jax.random.uniform(k[3], (3 * hidden_size,),
                                   jnp.float32, -s_gru, s_gru),
        "w_fc": jax.random.uniform(k[4], (output_dim, hidden_size),
                                   jnp.float32, -s_fc, s_fc),
        "b_fc": jax.random.uniform(k[5], (output_dim,),
                                   jnp.float32, -s_fc, s_fc),
    }


def _reference(x, h0, p):
    """Pure-JAX reference of the PyTorch GRUNet forward (for sanity check)."""
    H = p["w_hh"].shape[1]
    h = h0[0]
    for t in range(x.shape[1]):
        gi = x[:, t] @ p["w_ih"].T + p["b_ih"]
        gh = h @ p["w_hh"].T + p["b_hh"]
        r = jax.nn.sigmoid(gi[:, :H] + gh[:, :H])
        z = jax.nn.sigmoid(gi[:, H:2 * H] + gh[:, H:2 * H])
        n = jnp.tanh(gi[:, 2 * H:] + r * gh[:, 2 * H:])
        h = (1.0 - z) * n + z * h
    out = jnp.maximum(h, 0.0) @ p["w_fc"].T + p["b_fc"]
    return out.reshape(-1), h[None]


def _check(x, h0, params, O, **kw):
    out_flat, h_final = gru_net_forward(x, h0, params, **kw)
    jax.block_until_ready((out_flat, h_final))
    ref_out, ref_h = _reference(x, h0, params)
    B = x.shape[0]
    assert out_flat.shape == (B * O,)
    assert h_final.shape == (1, B, h0.shape[-1])
    assert jnp.allclose(out_flat, ref_out, atol=1e-4, rtol=1e-4)
    assert jnp.allclose(h_final, ref_h, atol=1e-4, rtol=1e-4)


if __name__ == "__main__":
    B, T, I, H, O = 4, 8, 16, 32, 4

    key = jax.random.PRNGKey(0)
    kx, kh, kp, kx2, kh2 = jax.random.split(key, 5)

    params = init_params(kp, I, H, O)

    # Main check at the module's toy shapes.
    x = jax.random.normal(kx, (B, T, I), jnp.float32)
    h0 = jax.random.normal(kh, (1, B, H), jnp.float32)   # init_hidden ~ kaiming normal
    _check(x, h0, params, O)

    # Exercise the time-padding (z-gate saturation) path and multi-chunk grid.
    _check(x, h0, params, O, chunk=3)

    # Exercise the parallel batch grid axis (Bp=16 -> Bt=8, two batch blocks).
    B2 = 12
    x2 = jax.random.normal(kx2, (B2, T, I), jnp.float32)
    h02 = jax.random.normal(kh2, (1, B2, H), jnp.float32)
    _check(x2, h02, params, O)

    print("KERNEL_OK")
</pallas_src>

<mosaic_0001>
module attributes {stable_mosaic.version = 11 : i64} {
  func.func @_gru_recurrence_kernel(%arg0: i32, %arg1: i32, %arg2: memref<8x8x96xf32, #tpu.memory_space<vmem>>, %arg3: memref<8x32xf32, #tpu.memory_space<vmem>>, %arg4: memref<32x96xf32, #tpu.memory_space<vmem>>, %arg5: memref<1x32xf32, #tpu.memory_space<vmem>>, %arg6: memref<8x32xf32, #tpu.memory_space<vmem>>, %arg7: memref<8x32xf32, #tpu.memory_space<vmem>>) attributes {dimension_semantics = [#tpu.dimension_semantics<parallel>, #tpu.dimension_semantics<arbitrary>], iteration_bounds = array<i64: 1, 1>, scalar_prefetch = 0 : i64, scratch_operands = 1 : i64, tpu.core_type = #tpu.core_type<tc>, window_params = [{transform_indices = @transform_0, window_bounds = array<i64: 8, 8, 96>}, {transform_indices = @transform_1, window_bounds = array<i64: 8, 32>}, {pipeline_mode = #tpu.pipeline_mode<synchronous>, transform_indices = @transform_2, window_bounds = array<i64: 32, 96>}, {pipeline_mode = #tpu.pipeline_mode<synchronous>, transform_indices = @transform_3, window_bounds = array<i64: 1, 32>}, {transform_indices = @transform_4, window_bounds = array<i64: 8, 32>}]} {
    %c0_i32 = arith.constant 0 : i32
    %0 = arith.cmpi eq, %arg1, %c0_i32 : i32
    %1 = arith.extui %0 : i1 to i32
    %c0_i32_0 = arith.constant 0 : i32
    %2 = arith.cmpi ne, %1, %c0_i32_0 : i32
    scf.if %2 {
      %c0_58 = arith.constant 0 : index
      %c0_59 = arith.constant 0 : index
      %266 = vector.load %arg3[%c0_58, %c0_59] : memref<8x32xf32, #tpu.memory_space<vmem>>, vector<8x32xf32>
      %c0_60 = arith.constant 0 : index
      %c0_61 = arith.constant 0 : index
      %267 = vector.load %arg7[%c0_60, %c0_61] : memref<8x32xf32, #tpu.memory_space<vmem>>, vector<8x32xf32>
      tpu.vector_store %arg7[%c0_60, %c0_61], %266 {strides = array<i32>} : memref<8x32xf32, #tpu.memory_space<vmem>>, vector<8x32xf32>,
    } else {
    }
    %c0 = arith.constant 0 : index
    %c0_1 = arith.constant 0 : index
    %3 = vector.load %arg4[%c0, %c0_1] : memref<32x96xf32, #tpu.memory_space<vmem>>, vector<32x96xf32>
    %c0_2 = arith.constant 0 : index
    %c0_3 = arith.constant 0 : index
    %4 = vector.load %arg5[%c0_2, %c0_3] : memref<1x32xf32, #tpu.memory_space<vmem>>, vector<1x32xf32>
    %c0_4 = arith.constant 0 : index
    %c0_5 = arith.constant 0 : index
    %5 = vector.load %arg7[%c0_4, %c0_5] : memref<8x32xf32, #tpu.memory_space<vmem>>, vector<8x32xf32>
    %c0_i32_6 = arith.constant 0 : i32
    %6 = arith.index_cast %c0_i32_6 : i32 to index
    %c0_7 = arith.constant 0 : index
    %c0_8 = arith.constant 0 : index
    %7 = vector.load %arg2[%6, %c0_7, %c0_8] : memref<8x8x96xf32, #tpu.memory_space<vmem>>, vector<1x8x96xf32>
    %8 = vector.shape_cast %7 : vector<1x8x96xf32> to vector<8x96xf32>
    %cst = arith.constant dense<0.000000e+00> : vector<8x96xf32>
    %9 = tpu.matmul %5, %3, %cst {dimension_numbers = #tpu.dot_dimension_numbers<[1], [0], [0], [1], [0, 0, 1, 1], [], []>} : vector<8x32xf32>, vector<32x96xf32>, vector<8x96xf32> -> vector<8x96xf32>
    %10 = vector.extract_strided_slice %8 {offsets = [0, 0], sizes = [8, 32], strides = [1, 1]} : vector<8x96xf32> to vector<8x32xf32>
    %11 = vector.extract_strided_slice %9 {offsets = [0, 0], sizes = [8, 32], strides = [1, 1]} : vector<8x96xf32> to vector<8x32xf32>
    %12 = arith.addf %10, %11 : vector<8x32xf32>
    %13 = arith.negf %12 : vector<8x32xf32>
    %14 = math.exp %13 : vector<8x32xf32>
    %cst_9 = arith.constant 1.000000e+00 : f32
    %15 = vector.broadcast %cst_9 : f32 to vector<8x32xf32>
    %16 = arith.addf %15, %14 : vector<8x32xf32>
    %17 = arith.divf %15, %16 : vector<8x32xf32>
    %18 = vector.extract_strided_slice %8 {offsets = [0, 32], sizes = [8, 32], strides = [1, 1]} : vector<8x96xf32> to vector<8x32xf32>
    %19 = vector.extract_strided_slice %9 {offsets = [0, 32], sizes = [8, 32], strides = [1, 1]} : vector<8x96xf32> to vector<8x32xf32>
    %20 = arith.addf %18, %19 : vector<8x32xf32>
    %21 = arith.negf %20 : vector<8x32xf32>
    %22 = math.exp %21 : vector<8x32xf32>
    %cst_10 = arith.constant 1.000000e+00 : f32
    %23 = vector.broadcast %cst_10 : f32 to vector<8x32xf32>
    %24 = arith.addf %23, %22 : vector<8x32xf32>
    %25 = arith.divf %23, %24 : vector<8x32xf32>
    %26 = vector.extract_strided_slice %8 {offsets = [0, 64], sizes = [8, 32], strides = [1, 1]} : vector<8x96xf32> to vector<8x32xf32>
    %27 = vector.extract_strided_slice %9 {offsets = [0, 64], sizes = [8, 32], strides = [1, 1]} : vector<8x96xf32> to vector<8x32xf32>
    %28 = vector.broadcast %4 : vector<1x32xf32> to vector<8x32xf32>
    %29 = arith.addf %27, %28 : vector<8x32xf32>
    %30 = arith.mulf %17, %29 : vector<8x32xf32>
    %31 = arith.addf %26, %30 : vector<8x32xf32>
    %32 = math.tanh %31 : vector<8x32xf32>
    %cst_11 = arith.constant 1.000000e+00 : f32
    %33 = vector.broadcast %cst_11 : f32 to vector<8x32xf32>
    %34 = arith.subf %33, %25 : vector<8x32xf32>
    %35 = arith.mulf %34, %32 : vector<8x32xf32>
    %36 = arith.mulf %25, %5 : vector<8x32xf32>
    %37 = arith.addf %35, %36 : vector<8x32xf32>
    %c1_i32 = arith.constant 1 : i32
    %38 = arith.index_cast %c1_i32 : i32 to index
    %c0_12 = arith.constant 0 : index
    %c0_13 = arith.constant 0 : index
    %39 = vector.load %arg2[%38, %c0_12, %c0_13] : memref<8x8x96xf32, #tpu.memory_space<vmem>>, vector<1x8x96xf32>
    %40 = vector.shape_cast %39 : vector<1x8x96xf32> to vector<8x96xf32>
    %cst_14 = arith.constant dense<0.000000e+00> : vector<8x96xf32>
    %41 = tpu.matmul %37, %3, %cst_14 {dimension_numbers = #tpu.dot_dimension_numbers<[1], [0], [0], [1], [0, 0, 1, 1], [], []>} : vector<8x32xf32>, vector<32x96xf32>, vector<8x96xf32> -> vector<8x96xf32>
    %42 = vector.extract_strided_slice %40 {offsets = [0, 0], sizes = [8, 32], strides = [1, 1]} : vector<8x96xf32> to vector<8x32xf32>
    %43 = vector.extract_strided_slice %41 {offsets = [0, 0], sizes = [8, 32], strides = [1, 1]} : vector<8x96xf32> to vector<8x32xf32>
    %44 = arith.addf %42, %43 : vector<8x32xf32>
    %45 = arith.negf %44 : vector<8x32xf32>
    %46 = math.exp %45 : vector<8x32xf32>
    %cst_15 = arith.constant 1.000000e+00 : f32
    %47 = vector.broadcast %cst_15 : f32 to vector<8x32xf32>
    %48 = arith.addf %47, %46 : vector<8x32xf32>
    %49 = arith.divf %47, %48 : vector<8x32xf32>
    %50 = vector.extract_strided_slice %40 {offsets = [0, 32], sizes = [8, 32], strides = [1, 1]} : vector<8x96xf32> to vector<8x32xf32>
    %51 = vector.extract_strided_slice %41 {offsets = [0, 32], sizes = [8, 32], strides = [1, 1]} : vector<8x96xf32> to vector<8x32xf32>
    %52 = arith.addf %50, %51 : vector<8x32xf32>
    %53 = arith.negf %52 : vector<8x32xf32>
    %54 = math.exp %53 : vector<8x32xf32>
    %cst_16 = arith.constant 1.000000e+00 : f32
    %55 = vector.broadcast %cst_16 : f32 to vector<8x32xf32>
    %56 = arith.addf %55, %54 : vector<8x32xf32>
    %57 = arith.divf %55, %56 : vector<8x32xf32>
    %58 = vector.extract_strided_slice %40 {offsets = [0, 64], sizes = [8, 32], strides = [1, 1]} : vector<8x96xf32> to vector<8x32xf32>
    %59 = vector.extract_strided_slice %41 {offsets = [0, 64], sizes = [8, 32], strides = [1, 1]} : vector<8x96xf32> to vector<8x32xf32>
    %60 = vector.broadcast %4 : vector<1x32xf32> to vector<8x32xf32>
    %61 = arith.addf %59, %60 : vector<8x32xf32>
    %62 = arith.mulf %49, %61 : vector<8x32xf32>
    %63 = arith.addf %58, %62 : vector<8x32xf32>
    %64 = math.tanh %63 : vector<8x32xf32>
    %cst_17 = arith.constant 1.000000e+00 : f32
    %65 = vector.broadcast %cst_17 : f32 to vector<8x32xf32>
    %66 = arith.subf %65, %57 : vector<8x32xf32>
    %67 = arith.mulf %66, %64 : vector<8x32xf32>
    %68 = arith.mulf %57, %37 : vector<8x32xf32>
    %69 = arith.addf %67, %68 : vector<8x32xf32>
    %c2_i32 = arith.constant 2 : i32
    %70 = arith.index_cast %c2_i32 : i32 to index
    %c0_18 = arith.constant 0 : index
    %c0_19 = arith.constant 0 : index
    %71 = vector.load %arg2[%70, %c0_18, %c0_19] : memref<8x8x96xf32, #tpu.memory_space<vmem>>, vector<1x8x96xf32>
    %72 = vector.shape_cast %71 : vector<1x8x96xf32> to vector<8x96xf32>
    %cst_20 = arith.constant dense<0.000000e+00> : vector<8x96xf32>
    %73 = tpu.matmul %69, %3, %cst_20 {dimension_numbers = #tpu.dot_dimension_numbers<[1], [0], [0], [1], [0, 0, 1, 1], [], []>} : vector<8x32xf32>, vector<32x96xf32>, vector<8x96xf32> -> vector<8x96xf32>
    %74 = vector.extract_strided_slice %72 {offsets = [0, 0], sizes = [8, 32], strides = [1, 1]} : vector<8x96xf32> to vector<8x32xf32>
    %75 = vector.extract_strided_slice %73 {offsets = [0, 0], sizes = [8, 32], strides = [1, 1]} : vector<8x96xf32> to vector<8x32xf32>
    %76 = arith.addf %74, %75 : vector<8x32xf32>
    %77 = arith.negf %76 : vector<8x32xf32>
    %78 = math.exp %77 : vector<8x32xf32>
    %cst_21 = arith.constant 1.000000e+00 : f32
    %79 = vector.broadcast %cst_21 : f32 to vector<8x32xf32>
    %80 = arith.addf %79, %78 : vector<8x32xf32>
    %81 = arith.divf %79, %80 : vector<8x32xf32>
    %82 = vector.extract_strided_slice %72 {offsets = [0, 32], sizes = [8, 32], strides = [1, 1]} : vector<8x96xf32> to vector<8x32xf32>
    %83 = vector.extract_strided_slice %73 {offsets = [0, 32], sizes = [8, 32], strides = [1, 1]} : vector<8x96xf32> to vector<8x32xf32>
    %84 = arith.addf %82, %83 : vector<8x32xf32>
    %85 = arith.negf %84 : vector<8x32xf32>
    %86 = math.exp %85 : vector<8x32xf32>
    %cst_22 = arith.constant 1.000000e+00 : f32
    %87 = vector.broadcast %cst_22 : f32 to vector<8x32xf32>
    %88 = arith.addf %87, %86 : vector<8x32xf32>
    %89 = arith.divf %87, %88 : vector<8x32xf32>
    %90 = vector.extract_strided_slice %72 {offsets = [0, 64], sizes = [8, 32], strides = [1, 1]} : vector<8x96xf32> to vector<8x32xf32>
    %91 = vector.extract_strided_slice %73 {offsets = [0, 64], sizes = [8, 32], strides = [1, 1]} : vector<8x96xf32> to vector<8x32xf32>
    %92 = vector.broadcast %4 : vector<1x32xf32> to vector<8x32xf32>
    %93 = arith.addf %91, %92 : vector<8x32xf32>
    %94 = arith.mulf %81, %93 : vector<8x32xf32>
    %95 = arith.addf %90, %94 : vector<8x32xf32>
    %96 = math.tanh %95 : vector<8x32xf32>
    %cst_23 = arith.constant 1.000000e+00 : f32
    %97 = vector.broadcast %cst_23 : f32 to vector<8x32xf32>
    %98 = arith.subf %97, %89 : vector<8x32xf32>
    %99 = arith.mulf %98, %96 : vector<8x32xf32>
    %100 = arith.mulf %89, %69 : vector<8x32xf32>
    %101 = arith.addf %99, %100 : vector<8x32xf32>
    %c3_i32 = arith.constant 3 : i32
    %102 = arith.index_cast %c3_i32 : i32 to index
    %c0_24 = arith.constant 0 : index
    %c0_25 = arith.constant 0 : index
    %103 = vector.load %arg2[%102, %c0_24, %c0_25] : memref<8x8x96xf32, #tpu.memory_space<vmem>>, vector<1x8x96xf32>
    %104 = vector.shape_cast %103 : vector<1x8x96xf32> to vector<8x96xf32>
    %cst_26 = arith.constant dense<0.000000e+00> : vector<8x96xf32>
    %105 = tpu.matmul %101, %3, %cst_26 {dimension_numbers = #tpu.dot_dimension_numbers<[1], [0], [0], [1], [0, 0, 1, 1], [], []>} : vector<8x32xf32>, vector<32x96xf32>, vector<8x96xf32> -> vector<8x96xf32>
    %106 = vector.extract_strided_slice %104 {offsets = [0, 0], sizes = [8, 32], strides = [1, 1]} : vector<8x96xf32> to vector<8x32xf32>
    %107 = vector.extract_strided_slice %105 {offsets = [0, 0], sizes = [8, 32], strides = [1, 1]} : vector<8x96xf32> to vector<8x32xf32>
    %108 = arith.addf %106, %107 : vector<8x32xf32>
    %109 = arith.negf %108 : vector<8x32xf32>
    %110 = math.exp %109 : vector<8x32xf32>
    %cst_27 = arith.constant 1.000000e+00 : f32
    %111 = vector.broadcast %cst_27 : f32 to vector<8x32xf32>
    %112 = arith.addf %111, %110 : vector<8x32xf32>
    %113 = arith.divf %111, %112 : vector<8x32xf32>
    %114 = vector.extract_strided_slice %104 {offsets = [0, 32], sizes = [8, 32], strides = [1, 1]} : vector<8x96xf32> to vector<8x32xf32>
    %115 = vector.extract_strided_slice %105 {offsets = [0, 32], sizes = [8, 32], strides = [1, 1]} : vector<8x96xf32> to vector<8x32xf32>
    %116 = arith.addf %114, %115 : vector<8x32xf32>
    %117 = arith.negf %116 : vector<8x32xf32>
    %118 = math.exp %117 : vector<8x32xf32>
    %cst_28 = arith.constant 1.000000e+00 : f32
    %119 = vector.broadcast %cst_28 : f32 to vector<8x32xf32>
    %120 = arith.addf %119, %118 : vector<8x32xf32>
    %121 = arith.divf %119, %120 : vector<8x32xf32>
    %122 = vector.extract_strided_slice %104 {offsets = [0, 64], sizes = [8, 32], strides = [1, 1]} : vector<8x96xf32> to vector<8x32xf32>
    %123 = vector.extract_strided_slice %105 {offsets = [0, 64], sizes = [8, 32], strides = [1, 1]} : vector<8x96xf32> to vector<8x32xf32>
    %124 = vector.broadcast %4 : vector<1x32xf32> to vector<8x32xf32>
    %125 = arith.addf %123, %124 : vector<8x32xf32>
    %126 = arith.mulf %113, %125 : vector<8x32xf32>
    %127 = arith.addf %122, %126 : vector<8x32xf32>
    %128 = math.tanh %127 : vector<8x32xf32>
    %cst_29 = arith.constant 1.000000e+00 : f32
    %129 = vector.broadcast %cst_29 : f32 to vector<8x32xf32>
    %130 = arith.subf %129, %121 : vector<8x32xf32>
    %131 = arith.mulf %130, %128 : vector<8x32xf32>
    %132 = arith.mulf %121, %101 : vector<8x32xf32>
    %133 = arith.addf %131, %132 : vector<8x32xf32>
    %c4_i32 = arith.constant 4 : i32
    %134 = arith.index_cast %c4_i32 : i32 to index
    %c0_30 = arith.constant 0 : index
    %c0_31 = arith.constant 0 : index
    %135 = vector.load %arg2[%134, %c0_30, %c0_31] : memref<8x8x96xf32, #tpu.memory_space<vmem>>, vector<1x8x96xf32>
    %136 = vector.shape_cast %135 : vector<1x8x96xf32> to vector<8x96xf32>
    %cst_32 = arith.constant dense<0.000000e+00> : vector<8x96xf32>
    %137 = tpu.matmul %133, %3, %cst_32 {dimension_numbers = #tpu.dot_dimension_numbers<[1], [0], [0], [1], [0, 0, 1, 1], [], []>} : vector<8x32xf32>, vector<32x96xf32>, vector<8x96xf32> -> vector<8x96xf32>
    %138 = vector.extract_strided_slice %136 {offsets = [0, 0], sizes = [8, 32], strides = [1, 1]} : vector<8x96xf32> to vector<8x32xf32>
    %139 = vector.extract_strided_slice %137 {offsets = [0, 0], sizes = [8, 32], strides = [1, 1]} : vector<8x96xf32> to vector<8x32xf32>
    %140 = arith.addf %138, %139 : vector<8x32xf32>
    %141 = arith.negf %140 : vector<8x32xf32>
    %142 = math.exp %141 : vector<8x32xf32>
    %cst_33 = arith.constant 1.000000e+00 : f32
    %143 = vector.broadcast %cst_33 : f32 to vector<8x32xf32>
    %144 = arith.addf %143, %142 : vector<8x32xf32>
    %145 = arith.divf %143, %144 : vector<8x32xf32>
    %146 = vector.extract_strided_slice %136 {offsets = [0, 32], sizes = [8, 32], strides = [1, 1]} : vector<8x96xf32> to vector<8x32xf32>
    %147 = vector.extract_strided_slice %137 {offsets = [0, 32], sizes = [8, 32], strides = [1, 1]} : vector<8x96xf32> to vector<8x32xf32>
    %148 = arith.addf %146, %147 : vector<8x32xf32>
    %149 = arith.negf %148 : vector<8x32xf32>
    %150 = math.exp %149 : vector<8x32xf32>
    %cst_34 = arith.constant 1.000000e+00 : f32
    %151 = vector.broadcast %cst_34 : f32 to vector<8x32xf32>
    %152 = arith.addf %151, %150 : vector<8x32xf32>
    %153 = arith.divf %151, %152 : vector<8x32xf32>
    %154 = vector.extract_strided_slice %136 {offsets = [0, 64], sizes = [8, 32], strides = [1, 1]} : vector<8x96xf32> to vector<8x32xf32>
    %155 = vector.extract_strided_slice %137 {offsets = [0, 64], sizes = [8, 32], strides = [1, 1]} : vector<8x96xf32> to vector<8x32xf32>
    %156 = vector.broadcast %4 : vector<1x32xf32> to vector<8x32xf32>
    %157 = arith.addf %155, %156 : vector<8x32xf32>
    %158 = arith.mulf %145, %157 : vector<8x32xf32>
    %159 = arith.addf %154, %158 : vector<8x32xf32>
    %160 = math.tanh %159 : vector<8x32xf32>
    %cst_35 = arith.constant 1.000000e+00 : f32
    %161 = vector.broadcast %cst_35 : f32 to vector<8x32xf32>
    %162 = arith.subf %161, %153 : vector<8x32xf32>
    %163 = arith.mulf %162, %160 : vector<8x32xf32>
    %164 = arith.mulf %153, %133 : vector<8x32xf32>
    %165 = arith.addf %163, %164 : vector<8x32xf32>
    %c5_i32 = arith.constant 5 : i32
    %166 = arith.index_cast %c5_i32 : i32 to index
    %c0_36 = arith.constant 0 : index
    %c0_37 = arith.constant 0 : index
    %167 = vector.load %arg2[%166, %c0_36, %c0_37] : memref<8x8x96xf32, #tpu.memory_space<vmem>>, vector<1x8x96xf32>
    %168 = vector.shape_cast %167 : vector<1x8x96xf32> to vector<8x96xf32>
    %cst_38 = arith.constant dense<0.000000e+00> : vector<8x96xf32>
    %169 = tpu.matmul %165, %3, %cst_38 {dimension_numbers = #tpu.dot_dimension_numbers<[1], [0], [0], [1], [0, 0, 1, 1], [], []>} : vector<8x32xf32>, vector<32x96xf32>, vector<8x96xf32> -> vector<8x96xf32>
    %170 = vector.extract_strided_slice %168 {offsets = [0, 0], sizes = [8, 32], strides = [1, 1]} : vector<8x96xf32> to vector<8x32xf32>
    %171 = vector.extract_strided_slice %169 {offsets = [0, 0], sizes = [8, 32], strides = [1, 1]} : vector<8x96xf32> to vector<8x32xf32>
    %172 = arith.addf %170, %171 : vector<8x32xf32>
    %173 = arith.negf %172 : vector<8x32xf32>
    %174 = math.exp %173 : vector<8x32xf32>
    %cst_39 = arith.constant 1.000000e+00 : f32
    %175 = vector.broadcast %cst_39 : f32 to vector<8x32xf32>
    %176 = arith.addf %175, %174 : vector<8x32xf32>
    %177 = arith.divf %175, %176 : vector<8x32xf32>
    %178 = vector.extract_strided_slice %168 {offsets = [0, 32], sizes = [8, 32], strides = [1, 1]} : vector<8x96xf32> to vector<8x32xf32>
    %179 = vector.extract_strided_slice %169 {offsets = [0, 32], sizes = [8, 32], strides = [1, 1]} : vector<8x96xf32> to vector<8x32xf32>
    %180 = arith.addf %178, %179 : vector<8x32xf32>
    %181 = arith.negf %180 : vector<8x32xf32>
    %182 = math.exp %181 : vector<8x32xf32>
    %cst_40 = arith.constant 1.000000e+00 : f32
    %183 = vector.broadcast %cst_40 : f32 to vector<8x32xf32>
    %184 = arith.addf %183, %182 : vector<8x32xf32>
    %185 = arith.divf %183, %184 : vector<8x32xf32>
    %186 = vector.extract_strided_slice %168 {offsets = [0, 64], sizes = [8, 32], strides = [1, 1]} : vector<8x96xf32> to vector<8x32xf32>
    %187 = vector.extract_strided_slice %169 {offsets = [0, 64], sizes = [8, 32], strides = [1, 1]} : vector<8x96xf32> to vector<8x32xf32>
    %188 = vector.broadcast %4 : vector<1x32xf32> to vector<8x32xf32>
    %189 = arith.addf %187, %188 : vector<8x32xf32>
    %190 = arith.mulf %177, %189 : vector<8x32xf32>
    %191 = arith.addf %186, %190 : vector<8x32xf32>
    %192 = math.tanh %191 : vector<8x32xf32>
    %cst_41 = arith.constant 1.000000e+00 : f32
    %193 = vector.broadcast %cst_41 : f32 to vector<8x32xf32>
    %194 = arith.subf %193, %185 : vector<8x32xf32>
    %195 = arith.mulf %194, %192 : vector<8x32xf32>
    %196 = arith.mulf %185, %165 : vector<8x32xf32>
    %197 = arith.addf %195, %196 : vector<8x32xf32>
    %c6_i32 = arith.constant 6 : i32
    %198 = arith.index_cast %c6_i32 : i32 to index
    %c0_42 = arith.constant 0 : index
    %c0_43 = arith.constant 0 : index
    %199 = vector.load %arg2[%198, %c0_42, %c0_43] : memref<8x8x96xf32, #tpu.memory_space<vmem>>, vector<1x8x96xf32>
    %200 = vector.shape_cast %199 : vector<1x8x96xf32> to vector<8x96xf32>
    %cst_44 = arith.constant dense<0.000000e+00> : vector<8x96xf32>
    %201 = tpu.matmul %197, %3, %cst_44 {dimension_numbers = #tpu.dot_dimension_numbers<[1], [0], [0], [1], [0, 0, 1, 1], [], []>} : vector<8x32xf32>, vector<32x96xf32>, vector<8x96xf32> -> vector<8x96xf32>
    %202 = vector.extract_strided_slice %200 {offsets = [0, 0], sizes = [8, 32], strides = [1, 1]} : vector<8x96xf32> to vector<8x32xf32>
    %203 = vector.extract_strided_slice %201 {offsets = [0, 0], sizes = [8, 32], strides = [1, 1]} : vector<8x96xf32> to vector<8x32xf32>
    %204 = arith.addf %202, %203 : vector<8x32xf32>
    %205 = arith.negf %204 : vector<8x32xf32>
    %206 = math.exp %205 : vector<8x32xf32>
    %cst_45 = arith.constant 1.000000e+00 : f32
    %207 = vector.broadcast %cst_45 : f32 to vector<8x32xf32>
    %208 = arith.addf %207, %206 : vector<8x32xf32>
    %209 = arith.divf %207, %208 : vector<8x32xf32>
    %210 = vector.extract_strided_slice %200 {offsets = [0, 32], sizes = [8, 32], strides = [1, 1]} : vector<8x96xf32> to vector<8x32xf32>
    %211 = vector.extract_strided_slice %201 {offsets = [0, 32], sizes = [8, 32], strides = [1, 1]} : vector<8x96xf32> to vector<8x32xf32>
    %212 = arith.addf %210, %211 : vector<8x32xf32>
    %213 = arith.negf %212 : vector<8x32xf32>
    %214 = math.exp %213 : vector<8x32xf32>
    %cst_46 = arith.constant 1.000000e+00 : f32
    %215 = vector.broadcast %cst_46 : f32 to vector<8x32xf32>
    %216 = arith.addf %215, %214 : vector<8x32xf32>
    %217 = arith.divf %215, %216 : vector<8x32xf32>
    %218 = vector.extract_strided_slice %200 {offsets = [0, 64], sizes = [8, 32], strides = [1, 1]} : vector<8x96xf32> to vector<8x32xf32>
    %219 = vector.extract_strided_slice %201 {offsets = [0, 64], sizes = [8, 32], strides = [1, 1]} : vector<8x96xf32> to vector<8x32xf32>
    %220 = vector.broadcast %4 : vector<1x32xf32> to vector<8x32xf32>
    %221 = arith.addf %219, %220 : vector<8x32xf32>
    %222 = arith.mulf %209, %221 : vector<8x32xf32>
    %223 = arith.addf %218, %222 : vector<8x32xf32>
    %224 = math.tanh %223 : vector<8x32xf32>
    %cst_47 = arith.constant 1.000000e+00 : f32
    %225 = vector.broadcast %cst_47 : f32 to vector<8x32xf32>
    %226 = arith.subf %225, %217 : vector<8x32xf32>
    %227 = arith.mulf %226, %224 : vector<8x32xf32>
    %228 = arith.mulf %217, %197 : vector<8x32xf32>
    %229 = arith.addf %227, %228 : vector<8x32xf32>
    %c7_i32 = arith.constant 7 : i32
    %230 = arith.index_cast %c7_i32 : i32 to index
    %c0_48 = arith.constant 0 : index
    %c0_49 = arith.constant 0 : index
    %231 = vector.load %arg2[%230, %c0_48, %c0_49] : memref<8x8x96xf32, #tpu.memory_space<vmem>>, vector<1x8x96xf32>
    %232 = vector.shape_cast %231 : vector<1x8x96xf32> to vector<8x96xf32>
    %cst_50 = arith.constant dense<0.000000e+00> : vector<8x96xf32>
    %233 = tpu.matmul %229, %3, %cst_50 {dimension_numbers = #tpu.dot_dimension_numbers<[1], [0], [0], [1], [0, 0, 1, 1], [], []>} : vector<8x32xf32>, vector<32x96xf32>, vector<8x96xf32> -> vector<8x96xf32>
    %234 = vector.extract_strided_slice %232 {offsets = [0, 0], sizes = [8, 32], strides = [1, 1]} : vector<8x96xf32> to vector<8x32xf32>
    %235 = vector.extract_strided_slice %233 {offsets = [0, 0], sizes = [8, 32], strides = [1, 1]} : vector<8x96xf32> to vector<8x32xf32>
    %236 = arith.addf %234, %235 : vector<8x32xf32>
    %237 = arith.negf %236 : vector<8x32xf32>
    %238 = math.exp %237 : vector<8x32xf32>
    %cst_51 = arith.constant 1.000000e+00 : f32
    %239 = vector.broadcast %cst_51 : f32 to vector<8x32xf32>
    %240 = arith.addf %239, %238 : vector<8x32xf32>
    %241 = arith.divf %239, %240 : vector<8x32xf32>
    %242 = vector.extract_strided_slice %232 {offsets = [0, 32], sizes = [8, 32], strides = [1, 1]} : vector<8x96xf32> to vector<8x32xf32>
    %243 = vector.extract_strided_slice %233 {offsets = [0, 32], sizes = [8, 32], strides = [1, 1]} : vector<8x96xf32> to vector<8x32xf32>
    %244 = arith.addf %242, %243 : vector<8x32xf32>
    %245 = arith.negf %244 : vector<8x32xf32>
    %246 = math.exp %245 : vector<8x32xf32>
    %cst_52 = arith.constant 1.000000e+00 : f32
    %247 = vector.broadcast %cst_52 : f32 to vector<8x32xf32>
    %248 = arith.addf %247, %246 : vector<8x32xf32>
    %249 = arith.divf %247, %248 : vector<8x32xf32>
    %250 = vector.extract_strided_slice %232 {offsets = [0, 64], sizes = [8, 32], strides = [1, 1]} : vector<8x96xf32> to vector<8x32xf32>
    %251 = vector.extract_strided_slice %233 {offsets = [0, 64], sizes = [8, 32], strides = [1, 1]} : vector<8x96xf32> to vector<8x32xf32>
    %252 = vector.broadcast %4 : vector<1x32xf32> to vector<8x32xf32>
    %253 = arith.addf %251, %252 : vector<8x32xf32>
    %254 = arith.mulf %241, %253 : vector<8x32xf32>
    %255 = arith.addf %250, %254 : vector<8x32xf32>
    %256 = math.tanh %255 : vector<8x32xf32>
    %cst_53 = arith.constant 1.000000e+00 : f32
    %257 = vector.broadcast %cst_53 : f32 to vector<8x32xf32>
    %258 = arith.subf %257, %249 : vector<8x32xf32>
    %259 = arith.mulf %258, %256 : vector<8x32xf32>
    %260 = arith.mulf %249, %229 : vector<8x32xf32>
    %261 = arith.addf %259, %260 : vector<8x32xf32>
    %c8_i32 = arith.constant 8 : i32
    %c0_54 = arith.constant 0 : index
    %c0_55 = arith.constant 0 : index
    %262 = vector.load %arg7[%c0_54, %c0_55] : memref<8x32xf32, #tpu.memory_space<vmem>>, vector<8x32xf32>
    tpu.vector_store %arg7[%c0_54, %c0_55], %261 {strides = array<i32>} : memref<8x32xf32, #tpu.memory_space<vmem>>, vector<8x32xf32>,
    %c0_i32_56 = arith.constant 0 : i32
    %263 = arith.cmpi eq, %arg1, %c0_i32_56 : i32
    %264 = arith.extui %263 : i1 to i32
    %c0_i32_57 = arith.constant 0 : i32
    %265 = arith.cmpi ne, %264, %c0_i32_57 : i32
    scf.if %265 {
      %c0_58 = arith.constant 0 : index
      %c0_59 = arith.constant 0 : index
      %266 = vector.load %arg6[%c0_58, %c0_59] : memref<8x32xf32, #tpu.memory_space<vmem>>, vector<8x32xf32>
      tpu.vector_store %arg6[%c0_58, %c0_59], %261 {strides = array<i32>} : memref<8x32xf32, #tpu.memory_space<vmem>>, vector<8x32xf32>,
    } else {
    }
    return
  }
  func.func @transform_0(%arg0: i32, %arg1: i32) -> (i32, i32, i32) {
    %c0_i32 = arith.constant 0 : i32
    %c0_i32_0 = arith.constant 0 : i32
    return %arg1, %arg0, %c0_i32 : i32, i32, i32
  }
  func.func @transform_1(%arg0: i32, %arg1: i32) -> (i32, i32) {
    %c0_i32 = arith.constant 0 : i32
    %c0_i32_0 = arith.constant 0 : i32
    return %arg0, %c0_i32 : i32, i32
  }
  func.func @transform_2(%arg0: i32, %arg1: i32) -> (i32, i32) {
    %c0_i32 = arith.constant 0 : i32
    %c0_i32_0 = arith.constant 0 : i32
    %c0_i32_1 = arith.constant 0 : i32
    return %c0_i32, %c0_i32_0 : i32, i32
  }
  func.func @transform_3(%arg0: i32, %arg1: i32) -> (i32, i32) {
    %c0_i32 = arith.constant 0 : i32
    %c0_i32_0 = arith.constant 0 : i32
    %c0_i32_1 = arith.constant 0 : i32
    return %c0_i32, %c0_i32_0 : i32, i32
  }
  func.func @transform_4(%arg0: i32, %arg1: i32) -> (i32, i32) {
    %c0_i32 = arith.constant 0 : i32
    %c0_i32_0 = arith.constant 0 : i32
    return %arg0, %c0_i32 : i32, i32
  }
}

</mosaic_0001>

<llo_original>
// kernel: gru_net_forward.1
$region0: #{gru_net_forward.1}
  #allocation0 [shape = 'u32[]', space=smem, size = 0x4, offset = 0x4, fixed_abs, tag = 'smem constant byte address 0x4 - core index']
  #allocation1 [shape = 'u32[144,128]{1,0:T(1,128)}', space=vmem, size = 0x12000, scoped, tag = 'internal scratch']
  #allocation2 [shape = 'f32[8,32]{1,0:T(8,128)}', space=vmem, size = 0x1000, scoped, tag = 'scratch operand']
  %s0 = inlined_call_operand.vmem [shape: f32[8,8,96], index: 0, kind: input, shape index: {}]
  %s1 = inlined_call_operand.vmem [shape: f32[8,32], index: 1, kind: input, shape index: {}]
  %s2 = inlined_call_operand.vmem [shape: f32[32,96], index: 2, kind: input, shape index: {}]
  %s3 = inlined_call_operand.vmem [shape: f32[1,32], index: 3, kind: input, shape index: {}]
  %s4 = inlined_call_operand.vmem [shape: f32[8,32], index: 4, kind: output, shape index: {}]
  %s5 = sld [smem:[#allocation0]]
  $region34: #{gru_net_forward.1} parent=0
    _
  %s7 = ssub.s32 1, %s5
  %s8 = scalar_select 0, %s7, %s5
  // Predicated region
  $region2: #{gru_net_forward.1} parent=0 // pred_check
    _
  $region3: #{gru_net_forward.1} parent=0 // pred_check_branch
    %10 = sbr.rel (0) target = $region5
  $region4: #{gru_net_forward.1} parent=0 // pred_region
    _
  $region5: #{gru_net_forward.1} parent=0 // pred_fallthru
    _
  // Predicated region
  $region6: #{gru_net_forward.1} parent=0 // pred_check
    _
  $region7: #{gru_net_forward.1} parent=0 // pred_check_branch
    %12 = sbr.rel (0) target = $region9
  $region8: #{gru_net_forward.1} parent=0 // pred_region
    _
  $region9: #{gru_net_forward.1} parent=0 // pred_fallthru
    _
  // Predicated region
  $region10: #{gru_net_forward.1} parent=0 // pred_check
    _
  $region11: #{gru_net_forward.1} parent=0 // pred_check_branch
    %14 = sbr.rel (0) target = $region13
  $region12: #{gru_net_forward.1} parent=0 // pred_region
    _
  $region13: #{gru_net_forward.1} parent=0 // pred_fallthru
    _
  // Predicated region
  $region14: #{gru_net_forward.1} parent=0 // pred_check
    _
  $region15: #{gru_net_forward.1} parent=0 // pred_check_branch
    %16 = sbr.rel (0) target = $region17
  $region16: #{gru_net_forward.1} parent=0 // pred_region
    _
  $region17: #{gru_net_forward.1} parent=0 // pred_fallthru
    _
  %p17 = scmp.eq.s32.totalorder 0, 0
  // Predicated region
  $region18: #{gru_net_forward.1} parent=0 // pred_check
    %p18 = pneg %p17
  $region19: #{gru_net_forward.1} parent=0 // pred_check_branch
    %20 = sbr.rel (%p18) target = $region21
  $region20: #{gru_net_forward.1} parent=0 // pred_region
    %v21 = vld [vmem:[%s1] sm:$0xff]
    %vm22 = vcmask 261120
    %23 = vst.msk [vmem:[#allocation2] sm:$0xff] %vm22, %v21
  $region21: #{gru_net_forward.1} parent=0 // pred_fallthru
    _
  %v24 = vld [vmem:[%s2] sm:$0xff]
  %v25 = vld [vmem:[%s2 + $0x8] sm:$0xff]
  %v26 = vld [vmem:[%s2 + $0x10] sm:$0xff]
  %v27 = vld [vmem:[%s2 + $0x18] sm:$0xff]
  %v28 = vld [vmem:[%s3] sm:$0x1]
  %v29 = vld [vmem:[#allocation2] sm:$0xff]
  %v30 = vld [vmem:[%s0] sm:$0xff]
  %vm31 = vcmask 261120
  %v33 = vsel %vm31, %v29, 0
  %35 = vmatprep.subr.mxu0 0.0
  %36 = vmatpush1.msra.mxu0 0.0
  %37 = vmatprep.subr.mxu0 0.0
  %38 = vmatpush1.msra.mxu0 0.0
  %39 = vmatprep.subr.mxu0 0.0
  %40 = vmatpush1.msra.mxu0 0.0
  %41 = vmatprep.subr.mxu0 0.0
  %42 = vmatpush1.msra.mxu0 0.0
  %43 = vmatprep.subr.mxu0 0.0
  %44 = vmatpush1.msra.mxu0 0.0
  %45 = vmatprep.subr.mxu0 0.0
  %46 = vmatpush1.msra.mxu0 0.0
  %47 = vmatprep.subr.mxu0 0.0
  %48 = vmatpush1.msra.mxu0 0.0
  %49 = vmatprep.subr.mxu0 0.0
  %50 = vmatpush1.msra.mxu0 0.0
  %51 = vmatprep.subr.mxu0 0.0
  %52 = vmatpush1.msra.mxu0 0.0
  %53 = vmatprep.subr.mxu0 0.0
  %54 = vmatpush1.msra.mxu0 0.0
  %55 = vmatprep.subr.mxu0 0.0
  %56 = vmatpush1.msra.mxu0 0.0
  %57 = vmatprep.subr.mxu0 0.0
  %58 = vmatpush1.msra.mxu0 0.0
  %59 = vmatprep.subr.mxu0 0.0
  %60 = vmatpush1.msra.mxu0 %v27
  %61 = vmatprep.subr.mxu0 0.0
  %62 = vmatpush1.msra.mxu0 %v26
  %63 = vmatprep.subr.mxu0 0.0
  %64 = vmatpush1.msra.mxu0 %v25
  %65 = vmatprep.subr.mxu0 0.0
  %66 = vmatpush1.msra.mxu0 %v24
  %67 = vmatprep.subr.mxu0 0.0
  %68 = vmatpush2.msra.mxu0 0.0
  %69 = vmatprep.subr.mxu0 0.0
  %70 = vmatpush2.msra.mxu0 0.0
  %71 = vmatprep.subr.mxu0 0.0
  %72 = vmatpush2.msra.mxu0 0.0
  %73 = vmatprep.subr.mxu0 0.0
  %74 = vmatpush2.msra.mxu0 0.0
  %75 = vmatprep.subr.mxu0 0.0
  %76 = vmatpush2.msra.mxu0 0.0
  %77 = vmatprep.subr.mxu0 0.0
  %78 = vmatpush2.msra.mxu0 0.0
  %79 = vmatprep.subr.mxu0 0.0
  %80 = vmatpush2.msra.mxu0 0.0
  %81 = vmatprep.subr.mxu0 0.0
  %82 = vmatpush2.msra.mxu0 0.0
  %83 = vmatprep.subr.mxu0 0.0
  %84 = vmatpush2.msra.mxu0 0.0
  %85 = vmatprep.subr.mxu0 0.0
  %86 = vmatpush2.msra.mxu0 0.0
  %87 = vmatprep.subr.mxu0 0.0
  %88 = vmatpush2.msra.mxu0 0.0
  %89 = vmatprep.subr.mxu0 0.0
  %90 = vmatpush2.msra.mxu0 0.0
  %91 = vmatprep.subr.mxu0 0.0
  %92 = vmatpush2.msra.mxu0 0.0
  %93 = vmatprep.subr.mxu0 0.0
  %94 = vmatpush2.msra.mxu0 0.0
  %95 = vmatprep.subr.mxu0 0.0
  %96 = vmatpush2.msra.mxu0 0.0
  %97 = vmatprep.subr.mxu0 0.0
  %98 = vmatpush2.msra.mxu0 0.0
  %99 = vmatprep.mubr.f32.mxu0 0.0
  %100 = vmatmul.mubr.f32.gmra.mxu0 %v33
  %v101 = vpop.f32.mrf.mxu0
  %v102 = vadd.f32 0.0, %v101
  %v103 = vpop.f32.mrf.mxu0
  %104 = vdwg.mxu0
  %v105 = vadd.f32 %v30, %v102
  %v106 = vxor.u32 %v105, 2147483648
  %v107 = vmul.f32 %v106, 1.442695
  %v108 = vpow.pop %v107
  %v109 = vadd.f32 %v108, 1.0
  %v110 = vrcp.pop %v109
  %v111 = vmul.f32 1.0, %v110
  %v113 = vlaneseq
  %v114 = vshrl.u32 %v113, 7
  %v115 = vsub.s32 0, %v114
  %v116 = vrot.slane %v28, %v115
  %117 = vrot.lane.b32.xlu0 %v116, 64
  %v118 = vpop.permute.xlu0 %117
  %v120 = vadd.f32 %v102, %v118
  %122 = vrot.lane.b32.xlu0 %v120, 64
  %v123 = vpop.permute.xlu0 %122
  %v125 = vmul.f32 %v111, %v123
  %127 = vrot.lane.b32.xlu0 %v125, 64
  %v128 = vpop.permute.xlu0 %127
  %v130 = vadd.f32 %v30, %v128
  %v131 = vtanh.pop %v130
  %v132 = vsub.f32 1.0, %v111
  %134 = vrot.lane.b32.xlu0 %v131, 96
  %v135 = vpop.permute.xlu0 %134
  %v137 = vmul.f32 %v132, %v135
  %138 = vrot.lane.b32.xlu0 %v29, 32
  %v139 = vpop.permute.xlu0 %138
  %v141 = vmul.f32 %v111, %v139
  %v142 = vadd.f32 %v137, %v141
  %s143 = scalar_lea.vmem %s0, 8
  %v144 = vld [vmem:[%s143] sm:$0xff]
  %146 = vrot.lane.b32.xlu0 %v142, 96
  %v147 = vpop.permute.xlu0 %146
  %v148 = vsel %vm31, %v147, 0
  %150 = vmatprep.subr.mxu0 0.0
  %151 = vmatpush1.msra.mxu0 0.0
  %152 = vmatprep.subr.mxu0 0.0
  %153 = vmatpush1.msra.mxu0 0.0
  %154 = vmatprep.subr.mxu0 0.0
  %155 = vmatpush1.msra.mxu0 0.0
  %156 = vmatprep.subr.mxu0 0.0
  %157 = vmatpush1.msra.mxu0 0.0
  %158 = vmatprep.subr.mxu0 0.0
  %159 = vmatpush1.msra.mxu0 0.0
  %160 = vmatprep.subr.mxu0 0.0
  %161 = vmatpush1.msra.mxu0 0.0
  %162 = vmatprep.subr.mxu0 0.0
  %163 = vmatpush1.msra.mxu0 0.0
  %164 = vmatprep.subr.mxu0 0.0
  %165 = vmatpush1.msra.mxu0 0.0
  %166 = vmatprep.subr.mxu0 0.0
  %167 = vmatpush1.msra.mxu0 0.0
  %168 = vmatprep.subr.mxu0 0.0
  %169 = vmatpush1.msra.mxu0 0.0
  %170 = vmatprep.subr.mxu0 0.0
  %171 = vmatpush1.msra.mxu0 0.0
  %172 = vmatprep.subr.mxu0 0.0
  %173 = vmatpush1.msra.mxu0 0.0
  %174 = vmatprep.subr.mxu0 0.0
  %175 = vmatpush1.msra.mxu0 %v27
  %176 = vmatprep.subr.mxu0 0.0
  %177 = vmatpush1.msra.mxu0 %v26
  %178 = vmatprep.subr.mxu0 0.0
  %179 = vmatpush1.msra.mxu0 %v25
  %180 = vmatprep.subr.mxu0 0.0
  %181 = vmatpush1.msra.mxu0 %v24
  %182 = vmatprep.subr.mxu0 0.0
  %183 = vmatpush2.msra.mxu0 0.0
  %184 = vmatprep.subr.mxu0 0.0
  %185 = vmatpush2.msra.mxu0 0.0
  %186 = vmatprep.subr.mxu0 0.0
  %187 = vmatpush2.msra.mxu0 0.0
  %188 = vmatprep.subr.mxu0 0.0
  %189 = vmatpush2.msra.mxu0 0.0
  %190 = vmatprep.subr.mxu0 0.0
  %191 = vmatpush2.msra.mxu0 0.0
  %192 = vmatprep.subr.mxu0 0.0
  %193 = vmatpush2.msra.mxu0 0.0
  %194 = vmatprep.subr.mxu0 0.0
  %195 = vmatpush2.msra.mxu0 0.0
  %196 = vmatprep.subr.mxu0 0.0
  %197 = vmatpush2.msra.mxu0 0.0
  %198 = vmatprep.subr.mxu0 0.0
  %199 = vmatpush2.msra.mxu0 0.0
  %200 = vmatprep.subr.mxu0 0.0
  %201 = vmatpush2.msra.mxu0 0.0
  %202 = vmatprep.subr.mxu0 0.0
  %203 = vmatpush2.msra.mxu0 0.0
  %204 = vmatprep.subr.mxu0 0.0
  %205 = vmatpush2.msra.mxu0 0.0
  %206 = vmatprep.subr.mxu0 0.0
  %207 = vmatpush2.msra.mxu0 0.0
  %208 = vmatprep.subr.mxu0 0.0
  %209 = vmatpush2.msra.mxu0 0.0
  %210 = vmatprep.subr.mxu0 0.0
  %211 = vmatpush2.msra.mxu0 0.0
  %212 = vmatprep.subr.mxu0 0.0
  %213 = vmatpush2.msra.mxu0 0.0
  %214 = vmatprep.mubr.f32.mxu0 0.0
  %215 = vmatmul.mubr.f32.gmra.mxu0 %v148
  %v216 = vpop.f32.mrf.mxu0
  %v217 = vadd.f32 0.0, %v216
  %v218 = vpop.f32.mrf.mxu0
  %219 = vdwg.mxu0
  %v220 = vadd.f32 %v144, %v217
  %v221 = vxor.u32 %v220, 2147483648
  %v222 = vmul.f32 %v221, 1.442695
  %v223 = vpow.pop %v222
  %v224 = vadd.f32 %v223, 1.0
  %v225 = vrcp.pop %v224
  %v226 = vmul.f32 1.0, %v225
  %v227 = vadd.f32 %v217, %v118
  %229 = vrot.lane.b32.xlu0 %v227, 64
  %v230 = vpop.permute.xlu0 %229
  %v232 = vmul.f32 %v226, %v230
  %234 = vrot.lane.b32.xlu0 %v232, 64
  %v235 = vpop.permute.xlu0 %234
  %v237 = vadd.f32 %v144, %v235
  %v238 = vtanh.pop %v237
  %v239 = vsub.f32 1.0, %v226
  %241 = vrot.lane.b32.xlu0 %v238, 96
  %v242 = vpop.permute.xlu0 %241
  %v244 = vmul.f32 %v239, %v242
  %v245 = vmul.f32 %v226, %v142
  %v246 = vadd.f32 %v244, %v245
  %s247 = scalar_lea.vmem %s0, 16
  %v248 = vld [vmem:[%s247] sm:$0xff]
  %250 = vrot.lane.b32.xlu0 %v246, 96
  %v251 = vpop.permute.xlu0 %250
  %v252 = vsel %vm31, %v251, 0
  %254 = vmatprep.subr.mxu0 0.0
  %255 = vmatpush1.msra.mxu0 0.0
  %256 = vmatprep.subr.mxu0 0.0
  %257 = vmatpush1.msra.mxu0 0.0
  %258 = vmatprep.subr.mxu0 0.0
  %259 = vmatpush1.msra.mxu0 0.0
  %260 = vmatprep.subr.mxu0 0.0
  %261 = vmatpush1.msra.mxu0 0.0
  %262 = vmatprep.subr.mxu0 0.0
  %263 = vmatpush1.msra.mxu0 0.0
  %264 = vmatprep.subr.mxu0 0.0
  %265 = vmatpush1.msra.mxu0 0.0
  %266 = vmatprep.subr.mxu0 0.0
  %267 = vmatpush1.msra.mxu0 0.0
  %268 = vmatprep.subr.mxu0 0.0
  %269 = vmatpush1.msra.mxu0 0.0
  %270 = vmatprep.subr.mxu0 0.0
  %271 = vmatpush1.msra.mxu0 0.0
  %272 = vmatprep.subr.mxu0 0.0
  %273 = vmatpush1.msra.mxu0 0.0
  %274 = vmatprep.subr.mxu0 0.0
  %275 = vmatpush1.msra.mxu0 0.0
  %276 = vmatprep.subr.mxu0 0.0
  %277 = vmatpush1.msra.mxu0 0.0
  %278 = vmatprep.subr.mxu0 0.0
  %279 = vmatpush1.msra.mxu0 %v27
  %280 = vmatprep.subr.mxu0 0.0
  %281 = vmatpush1.msra.mxu0 %v26
  %282 = vmatprep.subr.mxu0 0.0
  %283 = vmatpush1.msra.mxu0 %v25
  %284 = vmatprep.subr.mxu0 0.0
  %285 = vmatpush1.msra.mxu0 %v24
  %286 = vmatprep.subr.mxu0 0.0
  %287 = vmatpush2.msra.mxu0 0.0
  %288 = vmatprep.subr.mxu0 0.0
  %289 = vmatpush2.msra.mxu0 0.0
  %290 = vmatprep.subr.mxu0 0.0
  %291 = vmatpush2.msra.mxu0 0.0
  %292 = vmatprep.subr.mxu0 0.0
  %293 = vmatpush2.msra.mxu0 0.0
  %294 = vmatprep.subr.mxu0 0.0
  %295 = vmatpush2.msra.mxu0 0.0
  %296 = vmatprep.subr.mxu0 0.0
  %297 = vmatpush2.msra.mxu0 0.0
  %298 = vmatprep.subr.mxu0 0.0
  %299 = vmatpush2.msra.mxu0 0.0
  %300 = vmatprep.subr.mxu0 0.0
  %301 = vmatpush2.msra.mxu0 0.0
  %302 = vmatprep.subr.mxu0 0.0
  %303 = vmatpush2.msra.mxu0 0.0
  %304 = vmatprep.subr.mxu0 0.0
  %305 = vmatpush2.msra.mxu0 0.0
  %306 = vmatprep.subr.mxu0 0.0
  %307 = vmatpush2.msra.mxu0 0.0
  %308 = vmatprep.subr.mxu0 0.0
  %309 = vmatpush2.msra.mxu0 0.0
  %310 = vmatprep.subr.mxu0 0.0
  %311 = vmatpush2.msra.mxu0 0.0
  %312 = vmatprep.subr.mxu0 0.0
  %313 = vmatpush2.msra.mxu0 0.0
  %314 = vmatprep.subr.mxu0 0.0
  %315 = vmatpush2.msra.mxu0 0.0
  %316 = vmatprep.subr.mxu0 0.0
  %317 = vmatpush2.msra.mxu0 0.0
  %318 = vmatprep.mubr.f32.mxu0 0.0
  %319 = vmatmul.mubr.f32.gmra.mxu0 %v252
  %v320 = vpop.f32.mrf.mxu0
  %v321 = vadd.f32 0.0, %v320
  %v322 = vpop.f32.mrf.mxu0
  %323 = vdwg.mxu0
  %v324 = vadd.f32 %v248, %v321
  %v325 = vxor.u32 %v324, 2147483648
  %v326 = vmul.f32 %v325, 1.442695
  %v327 = vpow.pop %v326
  %v328 = vadd.f32 %v327, 1.0
  %v329 = vrcp.pop %v328
  %v330 = vmul.f32 1.0, %v329
  %v331 = vadd.f32 %v321, %v118
  %333 = vrot.lane.b32.xlu0 %v331, 64
  %v334 = vpop.permute.xlu0 %333
  %v336 = vmul.f32 %v330, %v334
  %338 = vrot.lane.b32.xlu0 %v336, 64
  %v339 = vpop.permute.xlu0 %338
  %v341 = vadd.f32 %v248, %v339
  %v342 = vtanh.pop %v341
  %v343 = vsub.f32 1.0, %v330
  %345 = vrot.lane.b32.xlu0 %v342, 96
  %v346 = vpop.permute.xlu0 %345
  %v348 = vmul.f32 %v343, %v346
  %v349 = vmul.f32 %v330, %v246
  %v350 = vadd.f32 %v348, %v349
  %s351 = scalar_lea.vmem %s0, 24
  %v352 = vld [vmem:[%s351] sm:$0xff]
  %354 = vrot.lane.b32.xlu0 %v350, 96
  %v355 = vpop.permute.xlu0 %354
  %v356 = vsel %vm31, %v355, 0
  %358 = vmatprep.subr.mxu0 0.0
  %359 = vmatpush1.msra.mxu0 0.0
  %360 = vmatprep.subr.mxu0 0.0
  %361 = vmatpush1.msra.mxu0 0.0
  %362 = vmatprep.subr.mxu0 0.0
  %363 = vmatpush1.msra.mxu0 0.0
  %364 = vmatprep.subr.mxu0 0.0
  %365 = vmatpush1.msra.mxu0 0.0
  %366 = vmatprep.subr.mxu0 0.0
  %367 = vmatpush1.msra.mxu0 0.0
  %368 = vmatprep.subr.mxu0 0.0
  %369 = vmatpush1.msra.mxu0 0.0
  %370 = vmatprep.subr.mxu0 0.0
  %371 = vmatpush1.msra.mxu0 0.0
  %372 = vmatprep.subr.mxu0 0.0
  %373 = vmatpush1.msra.mxu0 0.0
  %374 = vmatprep.subr.mxu0 0.0
  %375 = vmatpush1.msra.mxu0 0.0
  %376 = vmatprep.subr.mxu0 0.0
  %377 = vmatpush1.msra.mxu0 0.0
  %378 = vmatprep.subr.mxu0 0.0
  %379 = vmatpush1.msra.mxu0 0.0
  %380 = vmatprep.subr.mxu0 0.0
  %381 = vmatpush1.msra.mxu0 0.0
  %382 = vmatprep.subr.mxu0 0.0
  %383 = vmatpush1.msra.mxu0 %v27
  %384 = vmatprep.subr.mxu0 0.0
  %385 = vmatpush1.msra.mxu0 %v26
  %386 = vmatprep.subr.mxu0 0.0
  %387 = vmatpush1.msra.mxu0 %v25
  %388 = vmatprep.subr.mxu0 0.0
  %389 = vmatpush1.msra.mxu0 %v24
  %390 = vmatprep.subr.mxu0 0.0
  %391 = vmatpush2.msra.mxu0 0.0
  %392 = vmatprep.subr.mxu0 0.0
  %393 = vmatpush2.msra.mxu0 0.0
  %394 = vmatprep.subr.mxu0 0.0
  %395 = vmatpush2.msra.mxu0 0.0
  %396 = vmatprep.subr.mxu0 0.0
  %397 = vmatpush2.msra.mxu0 0.0
  %398 = vmatprep.subr.mxu0 0.0
  %399 = vmatpush2.msra.mxu0 0.0
  %400 = vmatprep.subr.mxu0 0.0
  %401 = vmatpush2.msra.mxu0 0.0
  %402 = vmatprep.subr.mxu0 0.0
  %403 = vmatpush2.msra.mxu0 0.0
  %404 = vmatprep.subr.mxu0 0.0
  %405 = vmatpush2.msra.mxu0 0.0
  %406 = vmatprep.subr.mxu0 0.0
  %407 = vmatpush2.msra.mxu0 0.0
  %408 = vmatprep.subr.mxu0 0.0
  %409 = vmatpush2.msra.mxu0 0.0
  %410 = vmatprep.subr.mxu0 0.0
  %411 = vmatpush2.msra.mxu0 0.0
  %412 = vmatprep.subr.mxu0 0.0
  %413 = vmatpush2.msra.mxu0 0.0
  %414 = vmatprep.subr.mxu0 0.0
  %415 = vmatpush2.msra.mxu0 0.0
  %416 = vmatprep.subr.mxu0 0.0
  %417 = vmatpush2.msra.mxu0 0.0
  %418 = vmatprep.subr.mxu0 0.0
  %419 = vmatpush2.msra.mxu0 0.0
  %420 = vmatprep.subr.mxu0 0.0
  %421 = vmatpush2.msra.mxu0 0.0
  %422 = vmatprep.mubr.f32.mxu0 0.0
  %423 = vmatmul.mubr.f32.gmra.mxu0 %v356
  %v424 = vpop.f32.mrf.mxu0
  %v425 = vadd.f32 0.0, %v424
  %v426 = vpop.f32.mrf.mxu0
  %427 = vdwg.mxu0
  %v428 = vadd.f32 %v352, %v425
  %v429 = vxor.u32 %v428, 2147483648
  %v430 = vmul.f32 %v429, 1.442695
  %v431 = vpow.pop %v430
  %v432 = vadd.f32 %v431, 1.0
  %v433 = vrcp.pop %v432
  %v434 = vmul.f32 1.0, %v433
  %v435 = vadd.f32 %v425, %v118
  %437 = vrot.lane.b32.xlu0 %v435, 64
  %v438 = vpop.permute.xlu0 %437
  %v440 = vmul.f32 %v434, %v438
  %442 = vrot.lane.b32.xlu0 %v440, 64
  %v443 = vpop.permute.xlu0 %442
  %v445 = vadd.f32 %v352, %v443
  %v446 = vtanh.pop %v445
  %v447 = vsub.f32 1.0, %v434
  %449 = vrot.lane.b32.xlu0 %v446, 96
  %v450 = vpop.permute.xlu0 %449
  %v452 = vmul.f32 %v447, %v450
  %v453 = vmul.f32 %v434, %v350
  %v454 = vadd.f32 %v452, %v453
  %s455 = scalar_lea.vmem %s0, 32
  %v456 = vld [vmem:[%s455] sm:$0xff]
  %458 = vrot.lane.b32.xlu0 %v454, 96
  %v459 = vpop.permute.xlu0 %458
  %v460 = vsel %vm31, %v459, 0
  %462 = vmatprep.subr.mxu0 0.0
  %463 = vmatpush1.msra.mxu0 0.0
  %464 = vmatprep.subr.mxu0 0.0
  %465 = vmatpush1.msra.mxu0 0.0
  %466 = vmatprep.subr.mxu0 0.0
  %467 = vmatpush1.msra.mxu0 0.0
  %468 = vmatprep.subr.mxu0 0.0
  %469 = vmatpush1.msra.mxu0 0.0
  %470 = vmatprep.subr.mxu0 0.0
  %471 = vmatpush1.msra.mxu0 0.0
  %472 = vmatprep.subr.mxu0 0.0
  %473 = vmatpush1.msra.mxu0 0.0
  %474 = vmatprep.subr.mxu0 0.0
  %475 = vmatpush1.msra.mxu0 0.0
  %476 = vmatprep.subr.mxu0 0.0
  %477 = vmatpush1.msra.mxu0 0.0
  %478 = vmatprep.subr.mxu0 0.0
  %479 = vmatpush1.msra.mxu0 0.0
  %480 = vmatprep.subr.mxu0 0.0
  %481 = vmatpush1.msra.mxu0 0.0
  %482 = vmatprep.subr.mxu0 0.0
  %483 = vmatpush1.msra.mxu0 0.0
  %484 = vmatprep.subr.mxu0 0.0
  %485 = vmatpush1.msra.mxu0 0.0
  %486 = vmatprep.subr.mxu0 0.0
  %487 = vmatpush1.msra.mxu0 %v27
  %488 = vmatprep.subr.mxu0 0.0
  %489 = vmatpush1.msra.mxu0 %v26
  %490 = vmatprep.subr.mxu0 0.0
  %491 = vmatpush1.msra.mxu0 %v25
  %492 = vmatprep.subr.mxu0 0.0
  %493 = vmatpush1.msra.mxu0 %v24
  %494 = vmatprep.subr.mxu0 0.0
  %495 = vmatpush2.msra.mxu0 0.0
  %496 = vmatprep.subr.mxu0 0.0
  %497 = vmatpush2.msra.mxu0 0.0
  %498 = vmatprep.subr.mxu0 0.0
  %499 = vmatpush2.msra.mxu0 0.0
  %500 = vmatprep.subr.mxu0 0.0
  %501 = vmatpush2.msra.mxu0 0.0
  %502 = vmatprep.subr.mxu0 0.0
  %503 = vmatpush2.msra.mxu0 0.0
  %504 = vmatprep.subr.mxu0 0.0
  %505 = vmatpush2.msra.mxu0 0.0
  %506 = vmatprep.subr.mxu0 0.0
  %507 = vmatpush2.msra.mxu0 0.0
  %508 = vmatprep.subr.mxu0 0.0
  %509 = vmatpush2.msra.mxu0 0.0
  %510 = vmatprep.subr.mxu0 0.0
  %511 = vmatpush2.msra.mxu0 0.0
  %512 = vmatprep.subr.mxu0 0.0
  %513 = vmatpush2.msra.mxu0 0.0
  %514 = vmatprep.subr.mxu0 0.0
  %515 = vmatpush2.msra.mxu0 0.0
  %516 = vmatprep.subr.mxu0 0.0
  %517 = vmatpush2.msra.mxu0 0.0
  %518 = vmatprep.subr.mxu0 0.0
  %519 = vmatpush2.msra.mxu0 0.0
  %520 = vmatprep.subr.mxu0 0.0
  %521 = vmatpush2.msra.mxu0 0.0
  %522 = vmatprep.subr.mxu0 0.0
  %523 = vmatpush2.msra.mxu0 0.0
  %524 = vmatprep.subr.mxu0 0.0
  %525 = vmatpush2.msra.mxu0 0.0
  %526 = vmatprep.mubr.f32.mxu0 0.0
  %527 = vmatmul.mubr.f32.gmra.mxu0 %v460
  %v528 = vpop.f32.mrf.mxu0
  %v529 = vadd.f32 0.0, %v528
  %v530 = vpop.f32.mrf.mxu0
  %531 = vdwg.mxu0
  %v532 = vadd.f32 %v456, %v529
  %v533 = vxor.u32 %v532, 2147483648
  %v534 = vmul.f32 %v533, 1.442695
  %v535 = vpow.pop %v534
  %v536 = vadd.f32 %v535, 1.0
  %v537 = vrcp.pop %v536
  %v538 = vmul.f32 1.0, %v537
  %v539 = vadd.f32 %v529, %v118
  %541 = vrot.lane.b32.xlu0 %v539, 64
  %v542 = vpop.permute.xlu0 %541
  %v544 = vmul.f32 %v538, %v542
  %546 = vrot.lane.b32.xlu0 %v544, 64
  %v547 = vpop.permute.xlu0 %546
  %v549 = vadd.f32 %v456, %v547
  %v550 = vtanh.pop %v549
  %v551 = vsub.f32 1.0, %v538
  %553 = vrot.lane.b32.xlu0 %v550, 96
  %v554 = vpop.permute.xlu0 %553
  %v556 = vmul.f32 %v551, %v554
  %v557 = vmul.f32 %v538, %v454
  %v558 = vadd.f32 %v556, %v557
  %s559 = scalar_lea.vmem %s0, 40
  %v560 = vld [vmem:[%s559] sm:$0xff]
  %562 = vrot.lane.b32.xlu0 %v558, 96
  %v563 = vpop.permute.xlu0 %562
  %v564 = vsel %vm31, %v563, 0
  %566 = vmatprep.subr.mxu0 0.0
  %567 = vmatpush1.msra.mxu0 0.0
  %568 = vmatprep.subr.mxu0 0.0
  %569 = vmatpush1.msra.mxu0 0.0
  %570 = vmatprep.subr.mxu0 0.0
  %571 = vmatpush1.msra.mxu0 0.0
  %572 = vmatprep.subr.mxu0 0.0
  %573 = vmatpush1.msra.mxu0 0.0
  %574 = vmatprep.subr.mxu0 0.0
  %575 = vmatpush1.msra.mxu0 0.0
  %576 = vmatprep.subr.mxu0 0.0
  %577 = vmatpush1.msra.mxu0 0.0
  %578 = vmatprep.subr.mxu0 0.0
  %579 = vmatpush1.msra.mxu0 0.0
  %580 = vmatprep.subr.mxu0 0.0
  %581 = vmatpush1.msra.mxu0 0.0
  %582 = vmatprep.subr.mxu0 0.0
  %583 = vmatpush1.msra.mxu0 0.0
  %584 = vmatprep.subr.mxu0 0.0
  %585 = vmatpush1.msra.mxu0 0.0
  %586 = vmatprep.subr.mxu0 0.0
  %587 = vmatpush1.msra.mxu0 0.0
  %588 = vmatprep.subr.mxu0 0.0
  %589 = vmatpush1.msra.mxu0 0.0
  %590 = vmatprep.subr.mxu0 0.0
  %591 = vmatpush1.msra.mxu0 %v27
  %592 = vmatprep.subr.mxu0 0.0
  %593 = vmatpush1.msra.mxu0 %v26
  %594 = vmatprep.subr.mxu0 0.0
  %595 = vmatpush1.msra.mxu0 %v25
  %596 = vmatprep.subr.mxu0 0.0
  %597 = vmatpush1.msra.mxu0 %v24
  %598 = vmatprep.subr.mxu0 0.0
  %599 = vmatpush2.msra.mxu0 0.0
  %600 = vmatprep.subr.mxu0 0.0
  %601 = vmatpush2.msra.mxu0 0.0
  %602 = vmatprep.subr.mxu0 0.0
  %603 = vmatpush2.msra.mxu0 0.0
  %604 = vmatprep.subr.mxu0 0.0
  %605 = vmatpush2.msra.mxu0 0.0
  %606 = vmatprep.subr.mxu0 0.0
  %607 = vmatpush2.msra.mxu0 0.0
  %608 = vmatprep.subr.mxu0 0.0
  %609 = vmatpush2.msra.mxu0 0.0
  %610 = vmatprep.subr.mxu0 0.0
  %611 = vmatpush2.msra.mxu0 0.0
  %612 = vmatprep.subr.mxu0 0.0
  %613 = vmatpush2.msra.mxu0 0.0
  %614 = vmatprep.subr.mxu0 0.0
  %615 = vmatpush2.msra.mxu0 0.0
  %616 = vmatprep.subr.mxu0 0.0
  %617 = vmatpush2.msra.mxu0 0.0
  %618 = vmatprep.subr.mxu0 0.0
  %619 = vmatpush2.msra.mxu0 0.0
  %620 = vmatprep.subr.mxu0 0.0
  %621 = vmatpush2.msra.mxu0 0.0
  %622 = vmatprep.subr.mxu0 0.0
  %623 = vmatpush2.msra.mxu0 0.0
  %624 = vmatprep.subr.mxu0 0.0
  %625 = vmatpush2.msra.mxu0 0.0
  %626 = vmatprep.subr.mxu0 0.0
  %627 = vmatpush2.msra.mxu0 0.0
  %628 = vmatprep.subr.mxu0 0.0
  %629 = vmatpush2.msra.mxu0 0.0
  %630 = vmatprep.mubr.f32.mxu0 0.0
  %631 = vmatmul.mubr.f32.gmra.mxu0 %v564
  %v632 = vpop.f32.mrf.mxu0
  %v633 = vadd.f32 0.0, %v632
  %v634 = vpop.f32.mrf.mxu0
  %635 = vdwg.mxu0
  %v636 = vadd.f32 %v560, %v633
  %v637 = vxor.u32 %v636, 2147483648
  %v638 = vmul.f32 %v637, 1.442695
  %v639 = vpow.pop %v638
  %v640 = vadd.f32 %v639, 1.0
  %v641 = vrcp.pop %v640
  %v642 = vmul.f32 1.0, %v641
  %v643 = vadd.f32 %v633, %v118
  %645 = vrot.lane.b32.xlu0 %v643, 64
  %v646 = vpop.permute.xlu0 %645
  %v648 = vmul.f32 %v642, %v646
  %650 = vrot.lane.b32.xlu0 %v648, 64
  %v651 = vpop.permute.xlu0 %650
  %v653 = vadd.f32 %v560, %v651
  %v654 = vtanh.pop %v653
  %v655 = vsub.f32 1.0, %v642
  %657 = vrot.lane.b32.xlu0 %v654, 96
  %v658 = vpop.permute.xlu0 %657
  %v660 = vmul.f32 %v655, %v658
  %v661 = vmul.f32 %v642, %v558
  %v662 = vadd.f32 %v660, %v661
  %s663 = scalar_lea.vmem %s0, 48
  %v664 = vld [vmem:[%s663] sm:$0xff]
  %666 = vrot.lane.b32.xlu0 %v662, 96
  %v667 = vpop.permute.xlu0 %666
  %v668 = vsel %vm31, %v667, 0
  %670 = vmatprep.subr.mxu0 0.0
  %671 = vmatpush1.msra.mxu0 0.0
  %672 = vmatprep.subr.mxu0 0.0
  %673 = vmatpush1.msra.mxu0 0.0
  %674 = vmatprep.subr.mxu0 0.0
  %675 = vmatpush1.msra.mxu0 0.0
  %676 = vmatprep.subr.mxu0 0.0
  %677 = vmatpush1.msra.mxu0 0.0
  %678 = vmatprep.subr.mxu0 0.0
  %679 = vmatpush1.msra.mxu0 0.0
  %680 = vmatprep.subr.mxu0 0.0
  %681 = vmatpush1.msra.mxu0 0.0
  %682 = vmatprep.subr.mxu0 0.0
  %683 = vmatpush1.msra.mxu0 0.0
  %684 = vmatprep.subr.mxu0 0.0
  %685 = vmatpush1.msra.mxu0 0.0
  %686 = vmatprep.subr.mxu0 0.0
  %687 = vmatpush1.msra.mxu0 0.0
  %688 = vmatprep.subr.mxu0 0.0
  %689 = vmatpush1.msra.mxu0 0.0
  %690 = vmatprep.subr.mxu0 0.0
  %691 = vmatpush1.msra.mxu0 0.0
  %692 = vmatprep.subr.mxu0 0.0
  %693 = vmatpush1.msra.mxu0 0.0
  %694 = vmatprep.subr.mxu0 0.0
  %695 = vmatpush1.msra.mxu0 %v27
  %696 = vmatprep.subr.mxu0 0.0
  %697 = vmatpush1.msra.mxu0 %v26
  %698 = vmatprep.subr.mxu0 0.0
  %699 = vmatpush1.msra.mxu0 %v25
  %700 = vmatprep.subr.mxu0 0.0
  %701 = vmatpush1.msra.mxu0 %v24
  %702 = vmatprep.subr.mxu0 0.0
  %703 = vmatpush2.msra.mxu0 0.0
  %704 = vmatprep.subr.mxu0 0.0
  %705 = vmatpush2.msra.mxu0 0.0
  %706 = vmatprep.subr.mxu0 0.0
  %707 = vmatpush2.msra.mxu0 0.0
  %708 = vmatprep.subr.mxu0 0.0
  %709 = vmatpush2.msra.mxu0 0.0
  %710 = vmatprep.subr.mxu0 0.0
  %711 = vmatpush2.msra.mxu0 0.0
  %712 = vmatprep.subr.mxu0 0.0
  %713 = vmatpush2.msra.mxu0 0.0
  %714 = vmatprep.subr.mxu0 0.0
  %715 = vmatpush2.msra.mxu0 0.0
  %716 = vmatprep.subr.mxu0 0.0
  %717 = vmatpush2.msra.mxu0 0.0
  %718 = vmatprep.subr.mxu0 0.0
  %719 = vmatpush2.msra.mxu0 0.0
  %720 = vmatprep.subr.mxu0 0.0
  %721 = vmatpush2.msra.mxu0 0.0
  %722 = vmatprep.subr.mxu0 0.0
  %723 = vmatpush2.msra.mxu0 0.0
  %724 = vmatprep.subr.mxu0 0.0
  %725 = vmatpush2.msra.mxu0 0.0
  %726 = vmatprep.subr.mxu0 0.0
  %727 = vmatpush2.msra.mxu0 0.0
  %728 = vmatprep.subr.mxu0 0.0
  %729 = vmatpush2.msra.mxu0 0.0
  %730 = vmatprep.subr.mxu0 0.0
  %731 = vmatpush2.msra.mxu0 0.0
  %732 = vmatprep.subr.mxu0 0.0
  %733 = vmatpush2.msra.mxu0 0.0
  %734 = vmatprep.mubr.f32.mxu0 0.0
  %735 = vmatmul.mubr.f32.gmra.mxu0 %v668
  %v736 = vpop.f32.mrf.mxu0
  %v737 = vadd.f32 0.0, %v736
  %v738 = vpop.f32.mrf.mxu0
  %739 = vdwg.mxu0
  %v740 = vadd.f32 %v664, %v737
  %v741 = vxor.u32 %v740, 2147483648
  %v742 = vmul.f32 %v741, 1.442695
  %v743 = vpow.pop %v742
  %v744 = vadd.f32 %v743, 1.0
  %v745 = vrcp.pop %v744
  %v746 = vmul.f32 1.0, %v745
  %v747 = vadd.f32 %v737, %v118
  %749 = vrot.lane.b32.xlu0 %v747, 64
  %v750 = vpop.permute.xlu0 %749
  %v752 = vmul.f32 %v746, %v750
  %754 = vrot.lane.b32.xlu0 %v752, 64
  %v755 = vpop.permute.xlu0 %754
  %v757 = vadd.f32 %v664, %v755
  %v758 = vtanh.pop %v757
  %v759 = vsub.f32 1.0, %v746
  %761 = vrot.lane.b32.xlu0 %v758, 96
  %v762 = vpop.permute.xlu0 %761
  %v764 = vmul.f32 %v759, %v762
  %v765 = vmul.f32 %v746, %v662
  %v766 = vadd.f32 %v764, %v765
  %s767 = scalar_lea.vmem %s0, 56
  %v768 = vld [vmem:[%s767] sm:$0xff]
  %770 = vrot.lane.b32.xlu0 %v766, 96
  %v771 = vpop.permute.xlu0 %770
  %v772 = vsel %vm31, %v771, 0
  %774 = vmatprep.subr.mxu0 0.0
  %775 = vmatpush1.msra.mxu0 0.0
  %776 = vmatprep.subr.mxu0 0.0
  %777 = vmatpush1.msra.mxu0 0.0
  %778 = vmatprep.subr.mxu0 0.0
  %779 = vmatpush1.msra.mxu0 0.0
  %780 = vmatprep.subr.mxu0 0.0
  %781 = vmatpush1.msra.mxu0 0.0
  %782 = vmatprep.subr.mxu0 0.0
  %783 = vmatpush1.msra.mxu0 0.0
  %784 = vmatprep.subr.mxu0 0.0
  %785 = vmatpush1.msra.mxu0 0.0
  %786 = vmatprep.subr.mxu0 0.0
  %787 = vmatpush1.msra.mxu0 0.0
  %788 = vmatprep.subr.mxu0 0.0
  %789 = vmatpush1.msra.mxu0 0.0
  %790 = vmatprep.subr.mxu0 0.0
  %791 = vmatpush1.msra.mxu0 0.0
  %792 = vmatprep.subr.mxu0 0.0
  %793 = vmatpush1.msra.mxu0 0.0
  %794 = vmatprep.subr.mxu0 0.0
  %795 = vmatpush1.msra.mxu0 0.0
  %796 = vmatprep.subr.mxu0 0.0
  %797 = vmatpush1.msra.mxu0 0.0
  %798 = vmatprep.subr.mxu0 0.0
  %799 = vmatpush1.msra.mxu0 %v27
  %800 = vmatprep.subr.mxu0 0.0
  %801 = vmatpush1.msra.mxu0 %v26
  %802 = vmatprep.subr.mxu0 0.0
  %803 = vmatpush1.msra.mxu0 %v25
  %804 = vmatprep.subr.mxu0 0.0
  %805 = vmatpush1.msra.mxu0 %v24
  %806 = vmatprep.subr.mxu0 0.0
  %807 = vmatpush2.msra.mxu0 0.0
  %808 = vmatprep.subr.mxu0 0.0
  %809 = vmatpush2.msra.mxu0 0.0
  %810 = vmatprep.subr.mxu0 0.0
  %811 = vmatpush2.msra.mxu0 0.0
  %812 = vmatprep.subr.mxu0 0.0
  %813 = vmatpush2.msra.mxu0 0.0
  %814 = vmatprep.subr.mxu0 0.0
  %815 = vmatpush2.msra.mxu0 0.0
  %816 = vmatprep.subr.mxu0 0.0
  %817 = vmatpush2.msra.mxu0 0.0
  %818 = vmatprep.subr.mxu0 0.0
  %819 = vmatpush2.msra.mxu0 0.0
  %820 = vmatprep.subr.mxu0 0.0
  %821 = vmatpush2.msra.mxu0 0.0
  %822 = vmatprep.subr.mxu0 0.0
  %823 = vmatpush2.msra.mxu0 0.0
  %824 = vmatprep.subr.mxu0 0.0
  %825 = vmatpush2.msra.mxu0 0.0
  %826 = vmatprep.subr.mxu0 0.0
  %827 = vmatpush2.msra.mxu0 0.0
  %828 = vmatprep.subr.mxu0 0.0
  %829 = vmatpush2.msra.mxu0 0.0
  %830 = vmatprep.subr.mxu0 0.0
  %831 = vmatpush2.msra.mxu0 0.0
  %832 = vmatprep.subr.mxu0 0.0
  %833 = vmatpush2.msra.mxu0 0.0
  %834 = vmatprep.subr.mxu0 0.0
  %835 = vmatpush2.msra.mxu0 0.0
  %836 = vmatprep.subr.mxu0 0.0
  %837 = vmatpush2.msra.mxu0 0.0
  %838 = vmatprep.mubr.f32.mxu0 0.0
  %839 = vmatmul.mubr.f32.gmra.mxu0 %v772
  %v840 = vpop.f32.mrf.mxu0
  %v841 = vadd.f32 0.0, %v840
  %v842 = vpop.f32.mrf.mxu0
  %843 = vdwg.mxu0
  %v844 = vadd.f32 %v768, %v841
  %v845 = vxor.u32 %v844, 2147483648
  %v846 = vmul.f32 %v845, 1.442695
  %v847 = vpow.pop %v846
  %v848 = vadd.f32 %v847, 1.0
  %v849 = vrcp.pop %v848
  %v850 = vmul.f32 1.0, %v849
  %v851 = vadd.f32 %v841, %v118
  %853 = vrot.lane.b32.xlu0 %v851, 64
  %v854 = vpop.permute.xlu0 %853
  %v856 = vmul.f32 %v850, %v854
  %858 = vrot.lane.b32.xlu0 %v856, 64
  %v859 = vpop.permute.xlu0 %858
  %v861 = vadd.f32 %v768, %v859
  %v862 = vtanh.pop %v861
  %v863 = vsub.f32 1.0, %v850
  %865 = vrot.lane.b32.xlu0 %v862, 96
  %v866 = vpop.permute.xlu0 %865
  %v868 = vmul.f32 %v863, %v866
  %v869 = vmul.f32 %v850, %v766
  %v870 = vadd.f32 %v868, %v869
  %872 = vrot.lane.b32.xlu0 %v870, 96
  %v873 = vpop.permute.xlu0 %872
  %875 = vst.msk [vmem:[#allocation2] sm:$0xff] %vm31, %v873
  // Predicated region
  $region22: #{gru_net_forward.1} parent=0 // pred_check
    %p876 = pneg %p17
  $region23: #{gru_net_forward.1} parent=0 // pred_check_branch
    %878 = sbr.rel (%p876) target = $region25
  $region24: #{gru_net_forward.1} parent=0 // pred_region
    %879 = vst.msk [vmem:[%s4] sm:$0xff] %vm31, %v873
  $region25: #{gru_net_forward.1} parent=0 // pred_fallthru
    _
  // Predicated region
  $region26: #{gru_net_forward.1} parent=0 // pred_check
    _
  $region27: #{gru_net_forward.1} parent=0 // pred_check_branch
    %881 = sbr.rel (0) target = $region29
  $region28: #{gru_net_forward.1} parent=0 // pred_region
    _
  $region29: #{gru_net_forward.1} parent=0 // pred_fallthru
    _
  // Predicated region
  $region30: #{gru_net_forward.1} parent=0 // pred_check
    _
  $region31: #{gru_net_forward.1} parent=0 // pred_check_branch
    %883 = sbr.rel (0) target = $region33
  $region32: #{gru_net_forward.1} parent=0 // pred_region
    _
  $region33: #{gru_net_forward.1} parent=0 // pred_fallthru
    _

</llo_original>
